<compile_context>
chip_gen: v7x
topology: tpu7x:2x2x1
jax: 0.10.0
libtpu: 0.0.40
codegen_flags: <defaults>
</compile_context>

<pallas_src>
import functools
import math

import jax
import jax.numpy as jnp
from jax import lax
from jax.experimental import pallas as pl
from jax.experimental.pallas import tpu as pltpu


def _split_flat_index(p, w):
    """Split a flat row-major index p into (row, col) for row width `w`."""
    if w & (w - 1) == 0:                       # power of two: shifts / ands only
        return p >> (w.bit_length() - 1), p & (w - 1)
    q = p // w
    return q, p - q * w


def _down_kernel(x_ref, w_ref, b_ref, sel_ref, o_ref, stack_ref,
                 *, H, W, B, Cin, Cin_pad):
    # x_ref:     (B, Cin, HW)          bf16  -- B images, NCHW flattened over (H, W)
    # w_ref:     (Cout, 9*Cin_pad)     bf16  -- cols tap-major: (dy*3+dx)*Cin_pad + ci
    # b_ref:     (Cout, 1)             f32
    # sel_ref:   (HW, (H//2)*(W//2))   f32   -- 0/1 stride-2 gather matrix (resident)
    # o_ref:     (B, Cout, (H//2)*(W//2)) f32
    # stack_ref: (9*Cin_pad, HW)       f32 scratch for the shifted-input stack
    HW = H * W

    # Padded channel rows (ci >= Cin) must be zero: their weight columns are
    # zero, but 0 * stale-garbage could still be NaN/Inf. Zeroing the whole
    # scratch is ~18 vreg stores -- negligible.
    stack_ref[...] = jnp.zeros_like(stack_ref)

    # Flat spatial coordinates (lane axis) and the 4 boundary-validity masks,
    # computed once per kernel invocation and shared by all taps / images.
    p = lax.broadcasted_iota(jnp.int32, (1, HW), 1)
    hh, ww = _split_flat_index(p, W)
    top_ok, bot_ok = hh >= 1, hh <= H - 2
    left_ok, right_ok = ww >= 1, ww <= W - 2

    tap_valid = []
    for dy in range(3):
        for dx in range(3):
            conds = []
            if dy == 0:
                conds.append(top_ok)
            if dy == 2:
                conds.append(bot_ok)
            if dx == 0:
                conds.append(left_ok)
            if dx == 2:
                conds.append(right_ok)
            tap_valid.append(
                functools.reduce(jnp.logical_and, conds) if conds else None)

    w_mat = w_ref[...]                       # (Cout, 9*Cin_pad) bf16
    bias = b_ref[...]                        # (Cout, 1) f32
    sel = sel_ref[...]                       # (HW, Hh*Wh) f32 (exact 0/1 gather)

    for b in range(B):                       # small fixed trip count: unrolled
        x = x_ref[b].astype(jnp.float32)     # (Cin, HW)

        # Build the 9-tap shifted / masked input stack (tap-major rows).
        # Masking the Cin-row input slabs (not the Cout-row outputs) keeps the
        # VPU select volume minimal; rolls go to the XLU.
        for dy in range(3):
            for dx in range(3):
                tap = dy * 3 + dx
                s = (dy - 1) * W + (dx - 1)          # flat shift of this tap
                slab = x if s == 0 else pltpu.roll(x, shift=(-s) % HW, axis=1)
                v = tap_valid[tap]
                if v is not None:                    # zero the pad=1 halo reads
                    slab = jnp.where(v, slab, 0.0)
                stack_ref[tap * Cin_pad:tap * Cin_pad + Cin, :] = slab

        # conv3x3: ONE MXU push, contraction depth 9*Cin_pad (bf16 operands,
        # f32 accumulation) -- the tap accumulation happens inside the MXU.
        acc = jnp.dot(w_mat, stack_ref[...].astype(jnp.bfloat16),
                      preferred_element_type=jnp.float32)     # (Cout, HW) f32

        # bias + LeakyReLU(0.1)
        y = acc + bias
        y = jnp.where(y > 0, y, 0.1 * y)

        # 2x2 / stride-2 max-pool: pair maxima via two lane rolls, then the
        # resident 0/1 selection matmul compacts the (even h, even w) lanes
        # into a dense (Cout, Hh*Wh) slab (exact gather in f32).
        m = jnp.maximum(y, pltpu.roll(y, shift=HW - 1, axis=1))   # pair-max along w
        m = jnp.maximum(m, pltpu.roll(m, shift=HW - W, axis=1))   # pair-max along h
        pooled = jnp.dot(m, sel, preferred_element_type=jnp.float32)
        o_ref[b] = pooled.astype(o_ref.dtype)


def pack_down_params(w_hwio, bias):
    """One-time weight repack: (3,3,Cin,Cout) -> (Cout, 9*Cin_pad) bf16 (tap-major,
    channel minor, zero-padded to a multiple of 8 channels per tap), plus (Cout,1) f32 bias."""
    kh, kw, Cin, Cout = w_hwio.shape
    assert (kh, kw) == (3, 3)
    cin_pad = ((Cin + 7) // 8) * 8          # f32 sublane-tile alignment of the stack
    w = jnp.transpose(w_hwio, (3, 0, 1, 2))                     # (Cout, 3, 3, Cin)
    w = jnp.pad(w, ((0, 0), (0, 0), (0, 0), (0, cin_pad - Cin)))
    w_mat = w.reshape(Cout, 9 * cin_pad).astype(jnp.bfloat16)
    b2d = bias.reshape(Cout, 1).astype(jnp.float32)
    return w_mat, b2d


def build_pool_selector(H, W):
    """0/1 matrix (HW, (H//2)*(W//2)): column q selects flat pixel 2*(q//Wh)*W + 2*(q%Wh)."""
    Hh, Wh = H // 2, W // 2
    q = jnp.arange(Hh * Wh, dtype=jnp.int32)
    src = 2 * (q // Wh) * W + 2 * (q % Wh)
    s = jnp.arange(H * W, dtype=jnp.int32)
    return (s[:, None] == src[None, :]).astype(jnp.float32)     # (HW, Hh*Wh)


def _pick_batch_block(N, max_block=8):
    """Fold as many images as possible into one grid step (amortizes the
    ~0.35us/step overhead) while keeping the block a divisor of N."""
    for b in range(min(N, max_block), 0, -1):
        if N % b == 0:
            return b
    return 1


def down_forward(x_nchw, w_mat, b2d, sel, *, batch_block=None):
    """Down block forward. x: (N, Cin, H, W) -> (N, Cout, H//2, W//2), NCHW.

    w_mat / b2d come from pack_down_params, sel from build_pool_selector."""
    N, Cin, H, W = x_nchw.shape
    Cout = w_mat.shape[0]
    cin_pad = w_mat.shape[1] // 9
    assert cin_pad * 9 == w_mat.shape[1] and cin_pad >= Cin
    assert H % 2 == 0 and W % 2 == 0
    Hh, Wh, HW = H // 2, W // 2, H * W
    assert sel.shape == (HW, Hh * Wh)

    B = batch_block if batch_block is not None else _pick_batch_block(N)
    assert N % B == 0

    # Free, contiguous view; bf16 kernel I/O (in a fused pipeline the producer
    # would already emit bf16 -- this cast is only for the standalone demo).
    x_flat = x_nchw.reshape(N, Cin, HW).astype(jnp.bfloat16)

    kernel = functools.partial(_down_kernel, H=H, W=W, B=B,
                               Cin=Cin, Cin_pad=cin_pad)
    # VMEM per step is tiny here (<1 MiB incl. double buffering), so the
    # default scoped-VMEM limit is fine on v5e/v6e/v7x.
    # Note: at real image sizes (H, W >= 32) Hh*Wh >= 256, so the output block
    # is lane-dense; at this toy size the whole output is only 4 KiB.
    out_flat = pl.pallas_call(
        kernel,
        out_shape=jax.ShapeDtypeStruct((N, Cout, Hh * Wh), jnp.float32),
        grid_spec=pltpu.PrefetchScalarGridSpec(
            num_scalar_prefetch=0,
            grid=(N // B,),
            in_specs=[
                pl.BlockSpec((B, Cin, HW), lambda n: (n, 0, 0)),
                pl.BlockSpec((Cout, 9 * cin_pad), lambda n: (0, 0)),   # resident
                pl.BlockSpec((Cout, 1), lambda n: (0, 0)),             # resident
                pl.BlockSpec((HW, Hh * Wh), lambda n: (0, 0)),         # resident
            ],
            out_specs=pl.BlockSpec((B, Cout, Hh * Wh), lambda n: (n, 0, 0)),
            scratch_shapes=[pltpu.VMEM((9 * cin_pad, HW), jnp.float32)],
        ),
        compiler_params=pltpu.CompilerParams(
            dimension_semantics=("parallel",)),
    )(x_flat, w_mat, b2d, sel)

    # Free view back to NCHW spatial dims.
    return out_flat.reshape(N, Cout, Hh, Wh)


def _reference(x_nchw, w_hwio, bias):
    y = lax.conv_general_dilated(
        x_nchw, w_hwio, window_strides=(1, 1), padding="SAME",
        dimension_numbers=("NCHW", "HWIO", "NCHW"))
    y = y + bias.reshape(1, -1, 1, 1)
    y = jnp.where(y > 0, y, 0.1 * y)
    y = lax.reduce_window(y, -jnp.inf, lax.max,
                          (1, 1, 2, 2), (1, 1, 2, 2), "VALID")
    return y


if __name__ == "__main__":
    # Down(n_in=4, n_out=8) on a (2, 4, 16, 16) input.
    N, Cin, Cout, H, W = 2, 4, 8, 16, 16

    key = jax.random.PRNGKey(0)
    kx, kw, kb = jax.random.split(key, 3)

    x = jax.random.normal(kx, (N, Cin, H, W), dtype=jnp.float32)
    fan_in = Cin * 3 * 3
    w = jax.random.normal(kw, (3, 3, Cin, Cout), dtype=jnp.float32) / math.sqrt(fan_in)
    b = jax.random.normal(kb, (Cout,), dtype=jnp.float32) * 0.01

    # Kernel I/O runs in bf16; compare against an f32 reference evaluated on
    # the same bf16-rounded values so the check isolates kernel numerics
    # (bf16 x bf16 MXU products are exact in the f32 accumulator).
    x_bf = x.astype(jnp.bfloat16).astype(jnp.float32)
    w_bf = w.astype(jnp.bfloat16).astype(jnp.float32)

    w_mat, b2d = pack_down_params(w_bf, b)      # one-time pack (bf16 weights)
    sel = build_pool_selector(H, W)             # one-time pool-selector build

    out = jax.block_until_ready(down_forward(x_bf, w_mat, b2d, sel))
    ref = jax.block_until_ready(_reference(x_bf, w_bf, b))

    assert out.shape == (N, Cout, H // 2, W // 2), out.shape
    assert jnp.allclose(out, ref, atol=1e-4, rtol=1e-4), \
        float(jnp.max(jnp.abs(out - ref)))

    print("KERNEL_OK")
</pallas_src>

<mosaic_0001>
module attributes {stable_mosaic.version = 11 : i64} {
  func.func @_down_kernel(%arg0: i32, %arg1: memref<2x4x256xbf16, #tpu.memory_space<vmem>>, %arg2: memref<8x72xbf16, #tpu.memory_space<vmem>>, %arg3: memref<8x1xf32, #tpu.memory_space<vmem>>, %arg4: memref<256x64xf32, #tpu.memory_space<vmem>>, %arg5: memref<2x8x64xf32, #tpu.memory_space<vmem>>, %arg6: memref<72x256xf32, #tpu.memory_space<vmem>>) attributes {dimension_semantics = [#tpu.dimension_semantics<parallel>], iteration_bounds = array<i64: 1>, scalar_prefetch = 0 : i64, scratch_operands = 1 : i64, tpu.core_type = #tpu.core_type<tc>, window_params = [{transform_indices = @transform_0, window_bounds = array<i64: 2, 4, 256>}, {pipeline_mode = #tpu.pipeline_mode<synchronous>, transform_indices = @transform_1, window_bounds = array<i64: 8, 72>}, {pipeline_mode = #tpu.pipeline_mode<synchronous>, transform_indices = @transform_2, window_bounds = array<i64: 8, 1>}, {pipeline_mode = #tpu.pipeline_mode<synchronous>, transform_indices = @transform_3, window_bounds = array<i64: 256, 64>}, {transform_indices = @transform_4, window_bounds = array<i64: 2, 8, 64>}]} {
    %cst = arith.constant 0.000000e+00 : f32
    %0 = vector.broadcast %cst : f32 to vector<72x256xf32>
    %c0 = arith.constant 0 : index
    %c0_0 = arith.constant 0 : index
    %1 = vector.load %arg6[%c0, %c0_0] : memref<72x256xf32, #tpu.memory_space<vmem>>, vector<72x256xf32>
    tpu.vector_store %arg6[%c0, %c0_0], %0 {strides = array<i32>} : memref<72x256xf32, #tpu.memory_space<vmem>>, vector<72x256xf32>,
    %2 = tpu.iota {dimensions = array<i32: 1>} : vector<1x256xi32>
    %c4_i32 = arith.constant 4 : i32
    %3 = vector.broadcast %c4_i32 : i32 to vector<1x256xi32>
    %4 = arith.shrsi %2, %3 : vector<1x256xi32>
    %c15_i32 = arith.constant 15 : i32
    %5 = vector.broadcast %c15_i32 : i32 to vector<1x256xi32>
    %6 = arith.andi %2, %5 : vector<1x256xi32>
    %c1_i32 = arith.constant 1 : i32
    %7 = vector.broadcast %c1_i32 : i32 to vector<1x256xi32>
    %8 = arith.cmpi sge, %4, %7 : vector<1x256xi32>
    %c14_i32 = arith.constant 14 : i32
    %9 = vector.broadcast %c14_i32 : i32 to vector<1x256xi32>
    %10 = arith.cmpi sle, %4, %9 : vector<1x256xi32>
    %c1_i32_1 = arith.constant 1 : i32
    %11 = vector.broadcast %c1_i32_1 : i32 to vector<1x256xi32>
    %12 = arith.cmpi sge, %6, %11 : vector<1x256xi32>
    %c14_i32_2 = arith.constant 14 : i32
    %13 = vector.broadcast %c14_i32_2 : i32 to vector<1x256xi32>
    %14 = arith.cmpi sle, %6, %13 : vector<1x256xi32>
    %15 = arith.andi %8, %12 : vector<1x256xi1>
    %16 = arith.andi %8, %14 : vector<1x256xi1>
    %17 = arith.andi %10, %12 : vector<1x256xi1>
    %18 = arith.andi %10, %14 : vector<1x256xi1>
    %c0_3 = arith.constant 0 : index
    %c0_4 = arith.constant 0 : index
    %19 = vector.load %arg2[%c0_3, %c0_4] : memref<8x72xbf16, #tpu.memory_space<vmem>>, vector<8x72xbf16>
    %c0_5 = arith.constant 0 : index
    %c0_6 = arith.constant 0 : index
    %20 = vector.load %arg3[%c0_5, %c0_6] : memref<8x1xf32, #tpu.memory_space<vmem>>, vector<8x1xf32>
    %c0_7 = arith.constant 0 : index
    %c0_8 = arith.constant 0 : index
    %21 = vector.load %arg4[%c0_7, %c0_8] : memref<256x64xf32, #tpu.memory_space<vmem>>, vector<256x64xf32>
    %c0_9 = arith.constant 0 : index
    %c0_10 = arith.constant 0 : index
    %c0_11 = arith.constant 0 : index
    %22 = vector.load %arg1[%c0_9, %c0_10, %c0_11] : memref<2x4x256xbf16, #tpu.memory_space<vmem>>, vector<1x4x256xbf16>
    %23 = vector.shape_cast %22 : vector<1x4x256xbf16> to vector<4x256xbf16>
    %24 = arith.extf %23 : vector<4x256xbf16> to vector<4x256xf32>
    %c17_i32 = arith.constant 17 : i32
    %25 = tpu.dynamic_rotate %24 by %c17_i32 dim 1 : vector<4x256xf32>, i32 -> vector<4x256xf32>
    %cst_12 = arith.constant 0.000000e+00 : f32
    %26 = vector.shape_cast %15 : vector<1x256xi1> to vector<1x256xi1>
    %27 = vector.broadcast %26 : vector<1x256xi1> to vector<4x256xi1>
    %28 = vector.broadcast %cst_12 : f32 to vector<4x256xf32>
    %29 = arith.select %27, %25, %28 : vector<4x256xi1>, vector<4x256xf32>
    %c0_13 = arith.constant 0 : index
    %c0_14 = arith.constant 0 : index
    %30 = vector.load %arg6[%c0_13, %c0_14] : memref<72x256xf32, #tpu.memory_space<vmem>>, vector<4x256xf32>
    tpu.vector_store %arg6[%c0_13, %c0_14], %29 {strides = array<i32>} : memref<72x256xf32, #tpu.memory_space<vmem>>, vector<4x256xf32>,
    %c16_i32 = arith.constant 16 : i32
    %31 = tpu.dynamic_rotate %24 by %c16_i32 dim 1 : vector<4x256xf32>, i32 -> vector<4x256xf32>
    %cst_15 = arith.constant 0.000000e+00 : f32
    %32 = vector.shape_cast %8 : vector<1x256xi1> to vector<1x256xi1>
    %33 = vector.broadcast %32 : vector<1x256xi1> to vector<4x256xi1>
    %34 = vector.broadcast %cst_15 : f32 to vector<4x256xf32>
    %35 = arith.select %33, %31, %34 : vector<4x256xi1>, vector<4x256xf32>
    %c8 = arith.constant 8 : index
    %c0_16 = arith.constant 0 : index
    %36 = vector.load %arg6[%c8, %c0_16] : memref<72x256xf32, #tpu.memory_space<vmem>>, vector<4x256xf32>
    tpu.vector_store %arg6[%c8, %c0_16], %35 {strides = array<i32>} : memref<72x256xf32, #tpu.memory_space<vmem>>, vector<4x256xf32>,
    %c15_i32_17 = arith.constant 15 : i32
    %37 = tpu.dynamic_rotate %24 by %c15_i32_17 dim 1 : vector<4x256xf32>, i32 -> vector<4x256xf32>
    %cst_18 = arith.constant 0.000000e+00 : f32
    %38 = vector.shape_cast %16 : vector<1x256xi1> to vector<1x256xi1>
    %39 = vector.broadcast %38 : vector<1x256xi1> to vector<4x256xi1>
    %40 = vector.broadcast %cst_18 : f32 to vector<4x256xf32>
    %41 = arith.select %39, %37, %40 : vector<4x256xi1>, vector<4x256xf32>
    %c16 = arith.constant 16 : index
    %c0_19 = arith.constant 0 : index
    %42 = vector.load %arg6[%c16, %c0_19] : memref<72x256xf32, #tpu.memory_space<vmem>>, vector<4x256xf32>
    tpu.vector_store %arg6[%c16, %c0_19], %41 {strides = array<i32>} : memref<72x256xf32, #tpu.memory_space<vmem>>, vector<4x256xf32>,
    %c1_i32_20 = arith.constant 1 : i32
    %43 = tpu.dynamic_rotate %24 by %c1_i32_20 dim 1 : vector<4x256xf32>, i32 -> vector<4x256xf32>
    %cst_21 = arith.constant 0.000000e+00 : f32
    %44 = vector.shape_cast %12 : vector<1x256xi1> to vector<1x256xi1>
    %45 = vector.broadcast %44 : vector<1x256xi1> to vector<4x256xi1>
    %46 = vector.broadcast %cst_21 : f32 to vector<4x256xf32>
    %47 = arith.select %45, %43, %46 : vector<4x256xi1>, vector<4x256xf32>
    %c24 = arith.constant 24 : index
    %c0_22 = arith.constant 0 : index
    %48 = vector.load %arg6[%c24, %c0_22] : memref<72x256xf32, #tpu.memory_space<vmem>>, vector<4x256xf32>
    tpu.vector_store %arg6[%c24, %c0_22], %47 {strides = array<i32>} : memref<72x256xf32, #tpu.memory_space<vmem>>, vector<4x256xf32>,
    %c32 = arith.constant 32 : index
    %c0_23 = arith.constant 0 : index
    %49 = vector.load %arg6[%c32, %c0_23] : memref<72x256xf32, #tpu.memory_space<vmem>>, vector<4x256xf32>
    tpu.vector_store %arg6[%c32, %c0_23], %24 {strides = array<i32>} : memref<72x256xf32, #tpu.memory_space<vmem>>, vector<4x256xf32>,
    %c255_i32 = arith.constant 255 : i32
    %50 = tpu.dynamic_rotate %24 by %c255_i32 dim 1 : vector<4x256xf32>, i32 -> vector<4x256xf32>
    %cst_24 = arith.constant 0.000000e+00 : f32
    %51 = vector.shape_cast %14 : vector<1x256xi1> to vector<1x256xi1>
    %52 = vector.broadcast %51 : vector<1x256xi1> to vector<4x256xi1>
    %53 = vector.broadcast %cst_24 : f32 to vector<4x256xf32>
    %54 = arith.select %52, %50, %53 : vector<4x256xi1>, vector<4x256xf32>
    %c40 = arith.constant 40 : index
    %c0_25 = arith.constant 0 : index
    %55 = vector.load %arg6[%c40, %c0_25] : memref<72x256xf32, #tpu.memory_space<vmem>>, vector<4x256xf32>
    tpu.vector_store %arg6[%c40, %c0_25], %54 {strides = array<i32>} : memref<72x256xf32, #tpu.memory_space<vmem>>, vector<4x256xf32>,
    %c241_i32 = arith.constant 241 : i32
    %56 = tpu.dynamic_rotate %24 by %c241_i32 dim 1 : vector<4x256xf32>, i32 -> vector<4x256xf32>
    %cst_26 = arith.constant 0.000000e+00 : f32
    %57 = vector.shape_cast %17 : vector<1x256xi1> to vector<1x256xi1>
    %58 = vector.broadcast %57 : vector<1x256xi1> to vector<4x256xi1>
    %59 = vector.broadcast %cst_26 : f32 to vector<4x256xf32>
    %60 = arith.select %58, %56, %59 : vector<4x256xi1>, vector<4x256xf32>
    %c48 = arith.constant 48 : index
    %c0_27 = arith.constant 0 : index
    %61 = vector.load %arg6[%c48, %c0_27] : memref<72x256xf32, #tpu.memory_space<vmem>>, vector<4x256xf32>
    tpu.vector_store %arg6[%c48, %c0_27], %60 {strides = array<i32>} : memref<72x256xf32, #tpu.memory_space<vmem>>, vector<4x256xf32>,
    %c240_i32 = arith.constant 240 : i32
    %62 = tpu.dynamic_rotate %24 by %c240_i32 dim 1 : vector<4x256xf32>, i32 -> vector<4x256xf32>
    %cst_28 = arith.constant 0.000000e+00 : f32
    %63 = vector.shape_cast %10 : vector<1x256xi1> to vector<1x256xi1>
    %64 = vector.broadcast %63 : vector<1x256xi1> to vector<4x256xi1>
    %65 = vector.broadcast %cst_28 : f32 to vector<4x256xf32>
    %66 = arith.select %64, %62, %65 : vector<4x256xi1>, vector<4x256xf32>
    %c56 = arith.constant 56 : index
    %c0_29 = arith.constant 0 : index
    %67 = vector.load %arg6[%c56, %c0_29] : memref<72x256xf32, #tpu.memory_space<vmem>>, vector<4x256xf32>
    tpu.vector_store %arg6[%c56, %c0_29], %66 {strides = array<i32>} : memref<72x256xf32, #tpu.memory_space<vmem>>, vector<4x256xf32>,
    %c239_i32 = arith.constant 239 : i32
    %68 = tpu.dynamic_rotate %24 by %c239_i32 dim 1 : vector<4x256xf32>, i32 -> vector<4x256xf32>
    %cst_30 = arith.constant 0.000000e+00 : f32
    %69 = vector.shape_cast %18 : vector<1x256xi1> to vector<1x256xi1>
    %70 = vector.broadcast %69 : vector<1x256xi1> to vector<4x256xi1>
    %71 = vector.broadcast %cst_30 : f32 to vector<4x256xf32>
    %72 = arith.select %70, %68, %71 : vector<4x256xi1>, vector<4x256xf32>
    %c64 = arith.constant 64 : index
    %c0_31 = arith.constant 0 : index
    %73 = vector.load %arg6[%c64, %c0_31] : memref<72x256xf32, #tpu.memory_space<vmem>>, vector<4x256xf32>
    tpu.vector_store %arg6[%c64, %c0_31], %72 {strides = array<i32>} : memref<72x256xf32, #tpu.memory_space<vmem>>, vector<4x256xf32>,
    %c0_32 = arith.constant 0 : index
    %c0_33 = arith.constant 0 : index
    %74 = vector.load %arg6[%c0_32, %c0_33] : memref<72x256xf32, #tpu.memory_space<vmem>>, vector<72x256xf32>
    %75 = arith.truncf %74 : vector<72x256xf32> to vector<72x256xbf16>
    %cst_34 = arith.constant dense<0.000000e+00> : vector<8x256xf32>
    %76 = tpu.matmul %19, %75, %cst_34 {dimension_numbers = #tpu.dot_dimension_numbers<[1], [0], [0], [1], [0, 0, 1, 1], [], []>} : vector<8x72xbf16>, vector<72x256xbf16>, vector<8x256xf32> -> vector<8x256xf32>
    %77 = vector.broadcast %20 : vector<8x1xf32> to vector<8x256xf32>
    %78 = arith.addf %76, %77 : vector<8x256xf32>
    %cst_35 = arith.constant 0.000000e+00 : f32
    %79 = vector.broadcast %cst_35 : f32 to vector<8x256xf32>
    %80 = arith.cmpf ogt, %78, %79 : vector<8x256xf32>
    %cst_36 = arith.constant 1.000000e-01 : f32
    %81 = vector.broadcast %cst_36 : f32 to vector<8x256xf32>
    %82 = arith.mulf %81, %78 : vector<8x256xf32>
    %83 = arith.select %80, %78, %82 : vector<8x256xi1>, vector<8x256xf32>
    %c255_i32_37 = arith.constant 255 : i32
    %84 = tpu.dynamic_rotate %83 by %c255_i32_37 dim 1 : vector<8x256xf32>, i32 -> vector<8x256xf32>
    %85 = arith.maximumf %83, %84 : vector<8x256xf32>
    %c240_i32_38 = arith.constant 240 : i32
    %86 = tpu.dynamic_rotate %85 by %c240_i32_38 dim 1 : vector<8x256xf32>, i32 -> vector<8x256xf32>
    %87 = arith.maximumf %85, %86 : vector<8x256xf32>
    %cst_39 = arith.constant dense<0.000000e+00> : vector<8x64xf32>
    %88 = tpu.matmul %87, %21, %cst_39 {dimension_numbers = #tpu.dot_dimension_numbers<[1], [0], [0], [1], [0, 0, 1, 1], [], []>} : vector<8x256xf32>, vector<256x64xf32>, vector<8x64xf32> -> vector<8x64xf32>
    %c0_40 = arith.constant 0 : index
    %c0_41 = arith.constant 0 : index
    %c0_42 = arith.constant 0 : index
    %89 = vector.load %arg5[%c0_40, %c0_41, %c0_42] : memref<2x8x64xf32, #tpu.memory_space<vmem>>, vector<1x8x64xf32>
    %90 = vector.shape_cast %89 : vector<1x8x64xf32> to vector<8x64xf32>
    %91 = vector.shape_cast %88 : vector<8x64xf32> to vector<1x8x64xf32>
    tpu.vector_store %arg5[%c0_40, %c0_41, %c0_42], %91 {strides = array<i32>} : memref<2x8x64xf32, #tpu.memory_space<vmem>>, vector<1x8x64xf32>,
    %c1 = arith.constant 1 : index
    %c0_43 = arith.constant 0 : index
    %c0_44 = arith.constant 0 : index
    %92 = vector.load %arg1[%c1, %c0_43, %c0_44] : memref<2x4x256xbf16, #tpu.memory_space<vmem>>, vector<1x4x256xbf16>
    %93 = vector.shape_cast %92 : vector<1x4x256xbf16> to vector<4x256xbf16>
    %94 = arith.extf %93 : vector<4x256xbf16> to vector<4x256xf32>
    %c17_i32_45 = arith.constant 17 : i32
    %95 = tpu.dynamic_rotate %94 by %c17_i32_45 dim 1 : vector<4x256xf32>, i32 -> vector<4x256xf32>
    %cst_46 = arith.constant 0.000000e+00 : f32
    %96 = vector.shape_cast %15 : vector<1x256xi1> to vector<1x256xi1>
    %97 = vector.broadcast %96 : vector<1x256xi1> to vector<4x256xi1>
    %98 = vector.broadcast %cst_46 : f32 to vector<4x256xf32>
    %99 = arith.select %97, %95, %98 : vector<4x256xi1>, vector<4x256xf32>
    %c0_47 = arith.constant 0 : index
    %c0_48 = arith.constant 0 : index
    %100 = vector.load %arg6[%c0_47, %c0_48] : memref<72x256xf32, #tpu.memory_space<vmem>>, vector<4x256xf32>
    tpu.vector_store %arg6[%c0_47, %c0_48], %99 {strides = array<i32>} : memref<72x256xf32, #tpu.memory_space<vmem>>, vector<4x256xf32>,
    %c16_i32_49 = arith.constant 16 : i32
    %101 = tpu.dynamic_rotate %94 by %c16_i32_49 dim 1 : vector<4x256xf32>, i32 -> vector<4x256xf32>
    %cst_50 = arith.constant 0.000000e+00 : f32
    %102 = vector.shape_cast %8 : vector<1x256xi1> to vector<1x256xi1>
    %103 = vector.broadcast %102 : vector<1x256xi1> to vector<4x256xi1>
    %104 = vector.broadcast %cst_50 : f32 to vector<4x256xf32>
    %105 = arith.select %103, %101, %104 : vector<4x256xi1>, vector<4x256xf32>
    %c8_51 = arith.constant 8 : index
    %c0_52 = arith.constant 0 : index
    %106 = vector.load %arg6[%c8_51, %c0_52] : memref<72x256xf32, #tpu.memory_space<vmem>>, vector<4x256xf32>
    tpu.vector_store %arg6[%c8_51, %c0_52], %105 {strides = array<i32>} : memref<72x256xf32, #tpu.memory_space<vmem>>, vector<4x256xf32>,
    %c15_i32_53 = arith.constant 15 : i32
    %107 = tpu.dynamic_rotate %94 by %c15_i32_53 dim 1 : vector<4x256xf32>, i32 -> vector<4x256xf32>
    %cst_54 = arith.constant 0.000000e+00 : f32
    %108 = vector.shape_cast %16 : vector<1x256xi1> to vector<1x256xi1>
    %109 = vector.broadcast %108 : vector<1x256xi1> to vector<4x256xi1>
    %110 = vector.broadcast %cst_54 : f32 to vector<4x256xf32>
    %111 = arith.select %109, %107, %110 : vector<4x256xi1>, vector<4x256xf32>
    %c16_55 = arith.constant 16 : index
    %c0_56 = arith.constant 0 : index
    %112 = vector.load %arg6[%c16_55, %c0_56] : memref<72x256xf32, #tpu.memory_space<vmem>>, vector<4x256xf32>
    tpu.vector_store %arg6[%c16_55, %c0_56], %111 {strides = array<i32>} : memref<72x256xf32, #tpu.memory_space<vmem>>, vector<4x256xf32>,
    %c1_i32_57 = arith.constant 1 : i32
    %113 = tpu.dynamic_rotate %94 by %c1_i32_57 dim 1 : vector<4x256xf32>, i32 -> vector<4x256xf32>
    %cst_58 = arith.constant 0.000000e+00 : f32
    %114 = vector.shape_cast %12 : vector<1x256xi1> to vector<1x256xi1>
    %115 = vector.broadcast %114 : vector<1x256xi1> to vector<4x256xi1>
    %116 = vector.broadcast %cst_58 : f32 to vector<4x256xf32>
    %117 = arith.select %115, %113, %116 : vector<4x256xi1>, vector<4x256xf32>
    %c24_59 = arith.constant 24 : index
    %c0_60 = arith.constant 0 : index
    %118 = vector.load %arg6[%c24_59, %c0_60] : memref<72x256xf32, #tpu.memory_space<vmem>>, vector<4x256xf32>
    tpu.vector_store %arg6[%c24_59, %c0_60], %117 {strides = array<i32>} : memref<72x256xf32, #tpu.memory_space<vmem>>, vector<4x256xf32>,
    %c32_61 = arith.constant 32 : index
    %c0_62 = arith.constant 0 : index
    %119 = vector.load %arg6[%c32_61, %c0_62] : memref<72x256xf32, #tpu.memory_space<vmem>>, vector<4x256xf32>
    tpu.vector_store %arg6[%c32_61, %c0_62], %94 {strides = array<i32>} : memref<72x256xf32, #tpu.memory_space<vmem>>, vector<4x256xf32>,
    %c255_i32_63 = arith.constant 255 : i32
    %120 = tpu.dynamic_rotate %94 by %c255_i32_63 dim 1 : vector<4x256xf32>, i32 -> vector<4x256xf32>
    %cst_64 = arith.constant 0.000000e+00 : f32
    %121 = vector.shape_cast %14 : vector<1x256xi1> to vector<1x256xi1>
    %122 = vector.broadcast %121 : vector<1x256xi1> to vector<4x256xi1>
    %123 = vector.broadcast %cst_64 : f32 to vector<4x256xf32>
    %124 = arith.select %122, %120, %123 : vector<4x256xi1>, vector<4x256xf32>
    %c40_65 = arith.constant 40 : index
    %c0_66 = arith.constant 0 : index
    %125 = vector.load %arg6[%c40_65, %c0_66] : memref<72x256xf32, #tpu.memory_space<vmem>>, vector<4x256xf32>
    tpu.vector_store %arg6[%c40_65, %c0_66], %124 {strides = array<i32>} : memref<72x256xf32, #tpu.memory_space<vmem>>, vector<4x256xf32>,
    %c241_i32_67 = arith.constant 241 : i32
    %126 = tpu.dynamic_rotate %94 by %c241_i32_67 dim 1 : vector<4x256xf32>, i32 -> vector<4x256xf32>
    %cst_68 = arith.constant 0.000000e+00 : f32
    %127 = vector.shape_cast %17 : vector<1x256xi1> to vector<1x256xi1>
    %128 = vector.broadcast %127 : vector<1x256xi1> to vector<4x256xi1>
    %129 = vector.broadcast %cst_68 : f32 to vector<4x256xf32>
    %130 = arith.select %128, %126, %129 : vector<4x256xi1>, vector<4x256xf32>
    %c48_69 = arith.constant 48 : index
    %c0_70 = arith.constant 0 : index
    %131 = vector.load %arg6[%c48_69, %c0_70] : memref<72x256xf32, #tpu.memory_space<vmem>>, vector<4x256xf32>
    tpu.vector_store %arg6[%c48_69, %c0_70], %130 {strides = array<i32>} : memref<72x256xf32, #tpu.memory_space<vmem>>, vector<4x256xf32>,
    %c240_i32_71 = arith.constant 240 : i32
    %132 = tpu.dynamic_rotate %94 by %c240_i32_71 dim 1 : vector<4x256xf32>, i32 -> vector<4x256xf32>
    %cst_72 = arith.constant 0.000000e+00 : f32
    %133 = vector.shape_cast %10 : vector<1x256xi1> to vector<1x256xi1>
    %134 = vector.broadcast %133 : vector<1x256xi1> to vector<4x256xi1>
    %135 = vector.broadcast %cst_72 : f32 to vector<4x256xf32>
    %136 = arith.select %134, %132, %135 : vector<4x256xi1>, vector<4x256xf32>
    %c56_73 = arith.constant 56 : index
    %c0_74 = arith.constant 0 : index
    %137 = vector.load %arg6[%c56_73, %c0_74] : memref<72x256xf32, #tpu.memory_space<vmem>>, vector<4x256xf32>
    tpu.vector_store %arg6[%c56_73, %c0_74], %136 {strides = array<i32>} : memref<72x256xf32, #tpu.memory_space<vmem>>, vector<4x256xf32>,
    %c239_i32_75 = arith.constant 239 : i32
    %138 = tpu.dynamic_rotate %94 by %c239_i32_75 dim 1 : vector<4x256xf32>, i32 -> vector<4x256xf32>
    %cst_76 = arith.constant 0.000000e+00 : f32
    %139 = vector.shape_cast %18 : vector<1x256xi1> to vector<1x256xi1>
    %140 = vector.broadcast %139 : vector<1x256xi1> to vector<4x256xi1>
    %141 = vector.broadcast %cst_76 : f32 to vector<4x256xf32>
    %142 = arith.select %140, %138, %141 : vector<4x256xi1>, vector<4x256xf32>
    %c64_77 = arith.constant 64 : index
    %c0_78 = arith.constant 0 : index
    %143 = vector.load %arg6[%c64_77, %c0_78] : memref<72x256xf32, #tpu.memory_space<vmem>>, vector<4x256xf32>
    tpu.vector_store %arg6[%c64_77, %c0_78], %142 {strides = array<i32>} : memref<72x256xf32, #tpu.memory_space<vmem>>, vector<4x256xf32>,
    %c0_79 = arith.constant 0 : index
    %c0_80 = arith.constant 0 : index
    %144 = vector.load %arg6[%c0_79, %c0_80] : memref<72x256xf32, #tpu.memory_space<vmem>>, vector<72x256xf32>
    %145 = arith.truncf %144 : vector<72x256xf32> to vector<72x256xbf16>
    %cst_81 = arith.constant dense<0.000000e+00> : vector<8x256xf32>
    %146 = tpu.matmul %19, %145, %cst_81 {dimension_numbers = #tpu.dot_dimension_numbers<[1], [0], [0], [1], [0, 0, 1, 1], [], []>} : vector<8x72xbf16>, vector<72x256xbf16>, vector<8x256xf32> -> vector<8x256xf32>
    %147 = vector.broadcast %20 : vector<8x1xf32> to vector<8x256xf32>
    %148 = arith.addf %146, %147 : vector<8x256xf32>
    %cst_82 = arith.constant 0.000000e+00 : f32
    %149 = vector.broadcast %cst_82 : f32 to vector<8x256xf32>
    %150 = arith.cmpf ogt, %148, %149 : vector<8x256xf32>
    %cst_83 = arith.constant 1.000000e-01 : f32
    %151 = vector.broadcast %cst_83 : f32 to vector<8x256xf32>
    %152 = arith.mulf %151, %148 : vector<8x256xf32>
    %153 = arith.select %150, %148, %152 : vector<8x256xi1>, vector<8x256xf32>
    %c255_i32_84 = arith.constant 255 : i32
    %154 = tpu.dynamic_rotate %153 by %c255_i32_84 dim 1 : vector<8x256xf32>, i32 -> vector<8x256xf32>
    %155 = arith.maximumf %153, %154 : vector<8x256xf32>
    %c240_i32_85 = arith.constant 240 : i32
    %156 = tpu.dynamic_rotate %155 by %c240_i32_85 dim 1 : vector<8x256xf32>, i32 -> vector<8x256xf32>
    %157 = arith.maximumf %155, %156 : vector<8x256xf32>
    %cst_86 = arith.constant dense<0.000000e+00> : vector<8x64xf32>
    %158 = tpu.matmul %157, %21, %cst_86 {dimension_numbers = #tpu.dot_dimension_numbers<[1], [0], [0], [1], [0, 0, 1, 1], [], []>} : vector<8x256xf32>, vector<256x64xf32>, vector<8x64xf32> -> vector<8x64xf32>
    %c1_87 = arith.constant 1 : index
    %c0_88 = arith.constant 0 : index
    %c0_89 = arith.constant 0 : index
    %159 = vector.load %arg5[%c1_87, %c0_88, %c0_89] : memref<2x8x64xf32, #tpu.memory_space<vmem>>, vector<1x8x64xf32>
    %160 = vector.shape_cast %159 : vector<1x8x64xf32> to vector<8x64xf32>
    %161 = vector.shape_cast %158 : vector<8x64xf32> to vector<1x8x64xf32>
    tpu.vector_store %arg5[%c1_87, %c0_88, %c0_89], %161 {strides = array<i32>} : memref<2x8x64xf32, #tpu.memory_space<vmem>>, vector<1x8x64xf32>,
    return
  }
  func.func @transform_0(%arg0: i32) -> (i32, i32, i32) {
    %c0_i32 = arith.constant 0 : i32
    %c0_i32_0 = arith.constant 0 : i32
    %c0_i32_1 = arith.constant 0 : i32
    return %arg0, %c0_i32, %c0_i32_0 : i32, i32, i32
  }
  func.func @transform_1(%arg0: i32) -> (i32, i32) {
    %c0_i32 = arith.constant 0 : i32
    %c0_i32_0 = arith.constant 0 : i32
    %c0_i32_1 = arith.constant 0 : i32
    return %c0_i32, %c0_i32_0 : i32, i32
  }
  func.func @transform_2(%arg0: i32) -> (i32, i32) {
    %c0_i32 = arith.constant 0 : i32
    %c0_i32_0 = arith.constant 0 : i32
    %c0_i32_1 = arith.constant 0 : i32
    return %c0_i32, %c0_i32_0 : i32, i32
  }
  func.func @transform_3(%arg0: i32) -> (i32, i32) {
    %c0_i32 = arith.constant 0 : i32
    %c0_i32_0 = arith.constant 0 : i32
    %c0_i32_1 = arith.constant 0 : i32
    return %c0_i32, %c0_i32_0 : i32, i32
  }
  func.func @transform_4(%arg0: i32) -> (i32, i32, i32) {
    %c0_i32 = arith.constant 0 : i32
    %c0_i32_0 = arith.constant 0 : i32
    %c0_i32_1 = arith.constant 0 : i32
    return %arg0, %c0_i32, %c0_i32_0 : i32, i32, i32
  }
}

</mosaic_0001>

<llo_original>
// kernel: tpu_custom_call.1
$region0: #{tpu_custom_call.1}
  #allocation0 [shape = 'u32[]', space=smem, size = 0x4, offset = 0x4, fixed_abs, tag = 'smem constant byte address 0x4 - core index']
  #allocation1 [shape = 'u32[144,128]{1,0:T(1,128)}', space=vmem, size = 0x12000, scoped, tag = 'internal scratch']
  #allocation2 [shape = 'f32[72,256]{1,0:T(8,128)}', space=vmem, size = 0x12000, scoped, tag = 'scratch operand']
  %s0 = inlined_call_operand.vmem [shape: bf16[2,4,256], index: 0, kind: input, shape index: {}]
  %s1 = inlined_call_operand.vmem [shape: bf16[8,72], index: 1, kind: input, shape index: {}]
  %s2 = inlined_call_operand.vmem [shape: f32[8,1], index: 2, kind: input, shape index: {}]
  %s3 = inlined_call_operand.vmem [shape: f32[256,64], index: 3, kind: input, shape index: {}]
  %s4 = inlined_call_operand.hbm [shape: f32[2,8,64], index: 4, kind: output, shape index: {}]
  %s5 = sld [smem:[#allocation0]]
  $region26: #{tpu_custom_call.1} parent=0
    _
  %s7 = ssub.s32 1, %s5
  %s8 = scalar_select 0, %s7, %s5
  $region1: #{tpu_custom_call.1} parent=0
    #allocation3 [shape = 'u8[8192]{0}', space=vmem, size = 0x2000, scoped, tag = 'output window, operand 0, single buffered']
    #allocation4 [shape = 's32[1]{0}', space=sflag, size = 0x4, scoped, tag = 'scoped memory for tpu_custom_call.1']
    %9 = vsyncpa [#allocation4], 0
    // Predicated region
    $region2: #{tpu_custom_call.1} parent=1 // pred_check
      _
    $region3: #{tpu_custom_call.1} parent=1 // pred_check_branch
      %11 = sbr.rel (0) target = $region5
    $region4: #{tpu_custom_call.1} parent=1 // pred_region
      _
    $region5: #{tpu_custom_call.1} parent=1 // pred_fallthru
      _
    // Predicated region
    $region6: #{tpu_custom_call.1} parent=1 // pred_check
      _
    $region7: #{tpu_custom_call.1} parent=1 // pred_check_branch
      %13 = sbr.rel (0) target = $region9
    $region8: #{tpu_custom_call.1} parent=1 // pred_region
      _
    $region9: #{tpu_custom_call.1} parent=1 // pred_fallthru
      _
    // Predicated region
    $region10: #{tpu_custom_call.1} parent=1 // pred_check
      _
    $region11: #{tpu_custom_call.1} parent=1 // pred_check_branch
      %15 = sbr.rel (0) target = $region13
    $region12: #{tpu_custom_call.1} parent=1 // pred_region
      _
    $region13: #{tpu_custom_call.1} parent=1 // pred_fallthru
      _
    // Predicated region
    $region14: #{tpu_custom_call.1} parent=1 // pred_check
      _
    $region15: #{tpu_custom_call.1} parent=1 // pred_check_branch
      %17 = sbr.rel (0) target = $region17
    $region16: #{tpu_custom_call.1} parent=1 // pred_region
      _
    $region17: #{tpu_custom_call.1} parent=1 // pred_fallthru
      _
    %19 = vst [vmem:[#allocation2] sm:$0xff] 0.0
    %20 = vst [vmem:[#allocation2 + $0x8] sm:$0xff] 0.0
    %21 = vst [vmem:[#allocation2 + $0x10] sm:$0xff] 0.0
    %22 = vst [vmem:[#allocation2 + $0x18] sm:$0xff] 0.0
    %23 = vst [vmem:[#allocation2 + $0x20] sm:$0xff] 0.0
    %24 = vst [vmem:[#allocation2 + $0x28] sm:$0xff] 0.0
    %25 = vst [vmem:[#allocation2 + $0x30] sm:$0xff] 0.0
    %26 = vst [vmem:[#allocation2 + $0x38] sm:$0xff] 0.0
    %27 = vst [vmem:[#allocation2 + $0x40] sm:$0xff] 0.0
    %28 = vst [vmem:[#allocation2 + $0x48] sm:$0xff] 0.0
    %29 = vst [vmem:[#allocation2 + $0x50] sm:$0xff] 0.0
    %30 = vst [vmem:[#allocation2 + $0x58] sm:$0xff] 0.0
    %31 = vst [vmem:[#allocation2 + $0x60] sm:$0xff] 0.0
    %32 = vst [vmem:[#allocation2 + $0x68] sm:$0xff] 0.0
    %33 = vst [vmem:[#allocation2 + $0x70] sm:$0xff] 0.0
    %34 = vst [vmem:[#allocation2 + $0x78] sm:$0xff] 0.0
    %35 = vst [vmem:[#allocation2 + $0x80] sm:$0xff] 0.0
    %36 = vst [vmem:[#allocation2 + $0x88] sm:$0xff] 0.0
    %v37 = vlaneseq
    %v38 = vand.u32 %v37, 127
    %v39 = vadd.s32 %v38, 128
    %v40 = vshra.s32 %v38, 4
    %v41 = vshra.s32 %v39, 4
    %v42 = vand.u32 %v38, 15
    %v43 = vand.u32 %v39, 15
    %vm44 = vcmp.ge.s32.totalorder %v40, 1
    %vm45 = vcmp.ge.s32.totalorder %v41, 1
    %vm46 = vcmp.le.s32.totalorder %v40, 14
    %vm47 = vcmp.le.s32.totalorder %v41, 14
    %vm48 = vcmp.ge.s32.totalorder %v42, 1
    %vm49 = vcmp.ge.s32.totalorder %v43, 1
    %vm50 = vcmp.le.s32.totalorder %v42, 14
    %vm51 = vcmp.le.s32.totalorder %v43, 14
    %vm52 = vmand %vm44, %vm48
    %vm53 = vmand %vm45, %vm49
    %vm54 = vmand %vm44, %vm50
    %vm55 = vmand %vm45, %vm51
    %vm56 = vmand %vm46, %vm48
    %vm57 = vmand %vm47, %vm49
    %vm58 = vmand %vm46, %vm50
    %vm59 = vmand %vm47, %vm51
    %v60 = vld [vmem:[%s1] sm:$0xf]
    %v61 = vld [vmem:[%s2] sm:$0xff]
    %v62 = vld [vmem:[%s3] sm:$0xff]
    %v63 = vld [vmem:[%s3 + $0x8] sm:$0xff]
    %v64 = vld [vmem:[%s3 + $0x10] sm:$0xff]
    %v65 = vld [vmem:[%s3 + $0x18] sm:$0xff]
    %v66 = vld [vmem:[%s3 + $0x20] sm:$0xff]
    %v67 = vld [vmem:[%s3 + $0x28] sm:$0xff]
    %v68 = vld [vmem:[%s3 + $0x30] sm:$0xff]
    %v69 = vld [vmem:[%s3 + $0x38] sm:$0xff]
    %v70 = vld [vmem:[%s3 + $0x40] sm:$0xff]
    %v71 = vld [vmem:[%s3 + $0x48] sm:$0xff]
    %v72 = vld [vmem:[%s3 + $0x50] sm:$0xff]
    %v73 = vld [vmem:[%s3 + $0x58] sm:$0xff]
    %v74 = vld [vmem:[%s3 + $0x60] sm:$0xff]
    %v75 = vld [vmem:[%s3 + $0x68] sm:$0xff]
    %v76 = vld [vmem:[%s3 + $0x70] sm:$0xff]
    %v77 = vld [vmem:[%s3 + $0x78] sm:$0xff]
    %v78 = vld [vmem:[%s3 + $0x80] sm:$0xff]
    %v79 = vld [vmem:[%s3 + $0x88] sm:$0xff]
    %v80 = vld [vmem:[%s3 + $0x90] sm:$0xff]
    %v81 = vld [vmem:[%s3 + $0x98] sm:$0xff]
    %v82 = vld [vmem:[%s3 + $0xa0] sm:$0xff]
    %v83 = vld [vmem:[%s3 + $0xa8] sm:$0xff]
    %v84 = vld [vmem:[%s3 + $0xb0] sm:$0xff]
    %v85 = vld [vmem:[%s3 + $0xb8] sm:$0xff]
    %v86 = vld [vmem:[%s3 + $0xc0] sm:$0xff]
    %v87 = vld [vmem:[%s3 + $0xc8] sm:$0xff]
    %v88 = vld [vmem:[%s3 + $0xd0] sm:$0xff]
    %v89 = vld [vmem:[%s3 + $0xd8] sm:$0xff]
    %v90 = vld [vmem:[%s3 + $0xe0] sm:$0xff]
    %v91 = vld [vmem:[%s3 + $0xe8] sm:$0xff]
    %v92 = vld [vmem:[%s3 + $0xf0] sm:$0xff]
    %v93 = vld [vmem:[%s3 + $0xf8] sm:$0xff]
    %v94 = vld [vmem:[%s0] sm:$0xf]
    %v95 = vunpack.c.l.bf16 %v94
    %v97 = vcombine.high %v95, %v95
    %99 = vrot.lane.b32.xlu0 %v95, 17
    %v100 = vpop.permute.xlu0 %99
    %101 = vrot.lane.b32.xlu0 %v97, 17
    %v102 = vpop.permute.xlu0 %101
    %vm103 = vcmp.lt.s32.totalorder %v38, 17
    %v104 = vsel %vm103, %v100, %v102
    %v105 = vsel %vm103, %v102, %v100
    %v106 = vsel %vm52, 1, 0
    %v107 = vsel %vm53, 1, 0
    %vm108 = vcmp.eq.s32.totalorder %v106, 1
    %vm109 = vcmp.eq.s32.totalorder %v107, 1
    %v110 = vsel %vm108, %v105, 0.0
    %v111 = vsel %vm109, %v104, 0.0
    %112 = vst [vmem:[#allocation2] sm:$0xf] %v110
    %113 = vst [vmem:[#allocation2 + $0x8] sm:$0xf] %v111
    %114 = vrot.lane.b32.xlu0 %v95, 16
    %v115 = vpop.permute.xlu0 %114
    %116 = vrot.lane.b32.xlu0 %v97, 16
    %v117 = vpop.permute.xlu0 %116
    %vm118 = vcmp.lt.s32.totalorder %v38, 16
    %v119 = vsel %vm118, %v115, %v117
    %v120 = vsel %vm118, %v117, %v115
    %v121 = vsel %vm44, 1, 0
    %v122 = vsel %vm45, 1, 0
    %vm123 = vcmp.eq.s32.totalorder %v121, 1
    %vm124 = vcmp.eq.s32.totalorder %v122, 1
    %v125 = vsel %vm123, %v120, 0.0
    %v126 = vsel %vm124, %v119, 0.0
    %127 = vst [vmem:[#allocation2 + $0x10] sm:$0xf] %v125
    %128 = vst [vmem:[#allocation2 + $0x18] sm:$0xf] %v126
    %129 = vrot.lane.b32.xlu0 %v95, 15
    %v130 = vpop.permute.xlu0 %129
    %131 = vrot.lane.b32.xlu0 %v97, 15
    %v132 = vpop.permute.xlu0 %131
    %vm133 = vcmp.lt.s32.totalorder %v38, 15
    %v134 = vsel %vm133, %v130, %v132
    %v135 = vsel %vm133, %v132, %v130
    %v136 = vsel %vm54, 1, 0
    %v137 = vsel %vm55, 1, 0
    %vm138 = vcmp.eq.s32.totalorder %v136, 1
    %vm139 = vcmp.eq.s32.totalorder %v137, 1
    %v140 = vsel %vm138, %v135, 0.0
    %v141 = vsel %vm139, %v134, 0.0
    %142 = vst [vmem:[#allocation2 + $0x20] sm:$0xf] %v140
    %143 = vst [vmem:[#allocation2 + $0x28] sm:$0xf] %v141
    %144 = vrot.lane.b32.xlu0 %v95, 1
    %v145 = vpop.permute.xlu0 %144
    %146 = vrot.lane.b32.xlu0 %v97, 1
    %v147 = vpop.permute.xlu0 %146
    %vm148 = vcmp.lt.s32.totalorder %v38, 1
    %v149 = vsel %vm148, %v145, %v147
    %v150 = vsel %vm148, %v147, %v145
    %v151 = vsel %vm48, 1, 0
    %v152 = vsel %vm49, 1, 0
    %vm153 = vcmp.eq.s32.totalorder %v151, 1
    %vm154 = vcmp.eq.s32.totalorder %v152, 1
    %v155 = vsel %vm153, %v150, 0.0
    %v156 = vsel %vm154, %v149, 0.0
    %157 = vst [vmem:[#allocation2 + $0x30] sm:$0xf] %v155
    %158 = vst [vmem:[#allocation2 + $0x38] sm:$0xf] %v156
    %159 = vst [vmem:[#allocation2 + $0x40] sm:$0xf] %v95
    %160 = vst [vmem:[#allocation2 + $0x48] sm:$0xf] %v97
    %161 = vrot.lane.b32.xlu0 %v95, 127
    %v162 = vpop.permute.xlu0 %161
    %163 = vrot.lane.b32.xlu0 %v97, 127
    %v164 = vpop.permute.xlu0 %163
    %vm165 = vcmp.lt.s32.totalorder %v38, 127
    %v166 = vsel %vm165, %v162, %v164
    %v167 = vsel %vm165, %v164, %v162
    %v168 = vsel %vm50, 1, 0
    %v169 = vsel %vm51, 1, 0
    %vm170 = vcmp.eq.s32.totalorder %v168, 1
    %vm171 = vcmp.eq.s32.totalorder %v169, 1
    %v172 = vsel %vm170, %v166, 0.0
    %v173 = vsel %vm171, %v167, 0.0
    %174 = vst [vmem:[#allocation2 + $0x50] sm:$0xf] %v172
    %175 = vst [vmem:[#allocation2 + $0x58] sm:$0xf] %v173
    %176 = vrot.lane.b32.xlu0 %v95, 113
    %v177 = vpop.permute.xlu0 %176
    %178 = vrot.lane.b32.xlu0 %v97, 113
    %v179 = vpop.permute.xlu0 %178
    %vm180 = vcmp.lt.s32.totalorder %v38, 113
    %v181 = vsel %vm180, %v177, %v179
    %v182 = vsel %vm180, %v179, %v177
    %v183 = vsel %vm56, 1, 0
    %v184 = vsel %vm57, 1, 0
    %vm185 = vcmp.eq.s32.totalorder %v183, 1
    %vm186 = vcmp.eq.s32.totalorder %v184, 1
    %v187 = vsel %vm185, %v181, 0.0
    %v188 = vsel %vm186, %v182, 0.0
    %189 = vst [vmem:[#allocation2 + $0x60] sm:$0xf] %v187
    %190 = vst [vmem:[#allocation2 + $0x68] sm:$0xf] %v188
    %191 = vrot.lane.b32.xlu0 %v95, 112
    %v192 = vpop.permute.xlu0 %191
    %193 = vrot.lane.b32.xlu0 %v97, 112
    %v194 = vpop.permute.xlu0 %193
    %vm195 = vcmp.lt.s32.totalorder %v38, 112
    %v196 = vsel %vm195, %v192, %v194
    %v197 = vsel %vm195, %v194, %v192
    %v198 = vsel %vm46, 1, 0
    %v199 = vsel %vm47, 1, 0
    %vm200 = vcmp.eq.s32.totalorder %v198, 1
    %vm201 = vcmp.eq.s32.totalorder %v199, 1
    %v202 = vsel %vm200, %v196, 0.0
    %v203 = vsel %vm201, %v197, 0.0
    %204 = vst [vmem:[#allocation2 + $0x70] sm:$0xf] %v202
    %205 = vst [vmem:[#allocation2 + $0x78] sm:$0xf] %v203
    %206 = vrot.lane.b32.xlu0 %v95, 111
    %v207 = vpop.permute.xlu0 %206
    %208 = vrot.lane.b32.xlu0 %v97, 111
    %v209 = vpop.permute.xlu0 %208
    %vm210 = vcmp.lt.s32.totalorder %v38, 111
    %v211 = vsel %vm210, %v207, %v209
    %v212 = vsel %vm210, %v209, %v207
    %v213 = vsel %vm58, 1, 0
    %v214 = vsel %vm59, 1, 0
    %vm215 = vcmp.eq.s32.totalorder %v213, 1
    %vm216 = vcmp.eq.s32.totalorder %v214, 1
    %v217 = vsel %vm215, %v211, 0.0
    %v218 = vsel %vm216, %v212, 0.0
    %219 = vst [vmem:[#allocation2 + $0x80] sm:$0xf] %v217
    %220 = vst [vmem:[#allocation2 + $0x88] sm:$0xf] %v218
    %v221 = vld [vmem:[#allocation2] sm:$0xff]
    %v222 = vld [vmem:[#allocation2 + $0x8] sm:$0xff]
    %v223 = vld [vmem:[#allocation2 + $0x10] sm:$0xff]
    %v224 = vld [vmem:[#allocation2 + $0x18] sm:$0xff]
    %v225 = vld [vmem:[#allocation2 + $0x20] sm:$0xff]
    %v226 = vld [vmem:[#allocation2 + $0x28] sm:$0xff]
    %v227 = vld [vmem:[#allocation2 + $0x30] sm:$0xff]
    %v228 = vld [vmem:[#allocation2 + $0x38] sm:$0xff]
    %v229 = vld [vmem:[#allocation2 + $0x40] sm:$0xff]
    %v230 = vld [vmem:[#allocation2 + $0x48] sm:$0xff]
    %v231 = vld [vmem:[#allocation2 + $0x50] sm:$0xff]
    %v232 = vld [vmem:[#allocation2 + $0x58] sm:$0xff]
    %v233 = vld [vmem:[#allocation2 + $0x60] sm:$0xff]
    %v234 = vld [vmem:[#allocation2 + $0x68] sm:$0xff]
    %v235 = vld [vmem:[#allocation2 + $0x70] sm:$0xff]
    %v236 = vld [vmem:[#allocation2 + $0x78] sm:$0xff]
    %v237 = vld [vmem:[#allocation2 + $0x80] sm:$0xff]
    %v238 = vld [vmem:[#allocation2 + $0x88] sm:$0xff]
    %v239 = vpack.c.bf16 %v223, %v221
    %v240 = vpack.c.bf16 %v224, %v222
    %v241 = vpack.c.bf16 %v227, %v225
    %v242 = vpack.c.bf16 %v228, %v226
    %v243 = vpack.c.bf16 %v231, %v229
    %v244 = vpack.c.bf16 %v232, %v230
    %v245 = vpack.c.bf16 %v235, %v233
    %v246 = vpack.c.bf16 %v236, %v234
    %v247 = vpack.c.bf16 %v237, %v237
    %v248 = vpack.c.bf16 %v238, %v238
    %250 = vset.pattern.permute.xlu0 0
    %251 = vperm.xlu0 %250, %v61
    %v252 = vpop.permute.xlu0 %251
    %vm254 = vcmask 588800
    %v256 = vsel %vm254, %v60, 0
    %vm258 = vcmask 1043456
    %v260 = vsel %vm258, %v247, 0
    %v263 = vsel %vm258, %v248, 0
    %265 = vmatprep.subr.bf16.mxu0 %v240
    %266 = vmatpush1.bf16.msra.mxu0 %v239
    %267 = vmatprep.subr.bf16.mxu0 %v242
    %268 = vmatpush1.bf16.msra.mxu0 %v241
    %269 = vmatprep.subr.bf16.mxu0 %v244
    %270 = vmatpush1.bf16.msra.mxu0 %v243
    %271 = vmatprep.subr.bf16.mxu0 %v246
    %272 = vmatpush1.bf16.msra.mxu0 %v245
    %273 = vmatprep.subr.bf16.mxu0 %v263
    %274 = vmatpush1.bf16.msra.mxu0 %v260
    %275 = vmatprep.subr.bf16.mxu0 0
    %276 = vmatpush1.bf16.msra.mxu0 0
    %277 = vmatprep.subr.bf16.mxu0 0
    %278 = vmatpush1.bf16.msra.mxu0 0
    %279 = vmatprep.subr.bf16.mxu0 0
    %280 = vmatpush1.bf16.msra.mxu0 0
    %281 = vmatprep.subr.bf16.mxu0 0
    %282 = vmatpush1.bf16.msra.mxu0 0
    %283 = vmatprep.subr.bf16.mxu0 0
    %284 = vmatpush1.bf16.msra.mxu0 0
    %285 = vmatprep.subr.bf16.mxu0 0
    %286 = vmatpush1.bf16.msra.mxu0 0
    %287 = vmatprep.subr.bf16.mxu0 0
    %288 = vmatpush1.bf16.msra.mxu0 0
    %289 = vmatprep.subr.bf16.mxu0 0
    %290 = vmatpush1.bf16.msra.mxu0 0
    %291 = vmatprep.subr.bf16.mxu0 0
    %292 = vmatpush1.bf16.msra.mxu0 0
    %293 = vmatprep.subr.bf16.mxu0 0
    %294 = vmatpush1.bf16.msra.mxu0 0
    %295 = vmatprep.subr.bf16.mxu0 0
    %296 = vmatpush1.bf16.msra.mxu0 0
    %297 = vmatprep.mubr.bf16.mxu0 0
    %298 = vmatmul.mubr.bf16.gmra.mrb[0].mxu0 %v256
    %v299 = vpop.f32.mrb[0].mxu0
    %v300 = vadd.f32 %v252, %v299
    %v301 = vpop.f32.mrb[0].mxu0
    %v302 = vadd.f32 %v252, %v301
    %v303 = vpop.f32.mrb[0].mxu0
    %v304 = vpop.f32.mrb[0].mxu0
    %305 = vdwg.mxu0
    %vm306 = vcmp.gt.f32.partialorder %v300, 0.0
    %vm307 = vcmp.gt.f32.partialorder %v302, 0.0
    %v308 = vmul.f32 %v300, 0.1
    %v309 = vmul.f32 %v302, 0.1
    %v310 = vsel %vm306, %v300, %v308
    %v311 = vsel %vm307, %v302, %v309
    %312 = vrot.lane.b32.xlu0 %v310, 127
    %v313 = vpop.permute.xlu0 %312
    %314 = vrot.lane.b32.xlu0 %v311, 127
    %v315 = vpop.permute.xlu0 %314
    %v316 = vsel %vm165, %v313, %v315
    %v317 = vsel %vm165, %v315, %v313
    %v318 = vmax.f32 %v310, %v316
    %v319 = vmax.f32 %v311, %v317
    %320 = vrot.lane.b32.xlu0 %v318, 112
    %v321 = vpop.permute.xlu0 %320
    %322 = vrot.lane.b32.xlu0 %v319, 112
    %v323 = vpop.permute.xlu0 %322
    %v324 = vsel %vm195, %v321, %v323
    %v325 = vsel %vm195, %v323, %v321
    %v326 = vmax.f32 %v318, %v324
    %v327 = vmax.f32 %v319, %v325
    %328 = vmatprep.subr.mxu0 0.0
    %329 = vmatpush1.msra.mxu0 %v62
    %330 = vmatprep.subr.mxu0 0.0
    %331 = vmatpush1.msra.mxu0 %v63
    %332 = vmatprep.subr.mxu0 0.0
    %333 = vmatpush1.msra.mxu0 %v64
    %334 = vmatprep.subr.mxu0 0.0
    %335 = vmatpush1.msra.mxu0 %v65
    %336 = vmatprep.subr.mxu0 0.0
    %337 = vmatpush1.msra.mxu0 %v66
    %338 = vmatprep.subr.mxu0 0.0
    %339 = vmatpush1.msra.mxu0 %v67
    %340 = vmatprep.subr.mxu0 0.0
    %341 = vmatpush1.msra.mxu0 %v68
    %342 = vmatprep.subr.mxu0 0.0
    %343 = vmatpush1.msra.mxu0 %v69
    %344 = vmatprep.subr.mxu0 0.0
    %345 = vmatpush1.msra.mxu0 %v70
    %346 = vmatprep.subr.mxu0 0.0
    %347 = vmatpush1.msra.mxu0 %v71
    %348 = vmatprep.subr.mxu0 0.0
    %349 = vmatpush1.msra.mxu0 %v72
    %350 = vmatprep.subr.mxu0 0.0
    %351 = vmatpush1.msra.mxu0 %v73
    %352 = vmatprep.subr.mxu0 0.0
    %353 = vmatpush1.msra.mxu0 %v74
    %354 = vmatprep.subr.mxu0 0.0
    %355 = vmatpush1.msra.mxu0 %v75
    %356 = vmatprep.subr.mxu0 0.0
    %357 = vmatpush1.msra.mxu0 %v76
    %358 = vmatprep.subr.mxu0 0.0
    %359 = vmatpush1.msra.mxu0 %v77
    %360 = vmatprep.subr.mxu0 0.0
    %361 = vmatpush1.msra.mxu0 %v78
    %362 = vmatprep.subr.mxu0 0.0
    %363 = vmatpush1.msra.mxu0 %v79
    %364 = vmatprep.subr.mxu0 0.0
    %365 = vmatpush1.msra.mxu0 %v80
    %366 = vmatprep.subr.mxu0 0.0
    %367 = vmatpush1.msra.mxu0 %v81
    %368 = vmatprep.subr.mxu0 0.0
    %369 = vmatpush1.msra.mxu0 %v82
    %370 = vmatprep.subr.mxu0 0.0
    %371 = vmatpush1.msra.mxu0 %v83
    %372 = vmatprep.subr.mxu0 0.0
    %373 = vmatpush1.msra.mxu0 %v84
    %374 = vmatprep.subr.mxu0 0.0
    %375 = vmatpush1.msra.mxu0 %v85
    %376 = vmatprep.subr.mxu0 0.0
    %377 = vmatpush1.msra.mxu0 %v86
    %378 = vmatprep.subr.mxu0 0.0
    %379 = vmatpush1.msra.mxu0 %v87
    %380 = vmatprep.subr.mxu0 0.0
    %381 = vmatpush1.msra.mxu0 %v88
    %382 = vmatprep.subr.mxu0 0.0
    %383 = vmatpush1.msra.mxu0 %v89
    %384 = vmatprep.subr.mxu0 0.0
    %385 = vmatpush1.msra.mxu0 %v90
    %386 = vmatprep.subr.mxu0 0.0
    %387 = vmatpush1.msra.mxu0 %v91
    %388 = vmatprep.subr.mxu0 0.0
    %389 = vmatpush1.msra.mxu0 %v92
    %390 = vmatprep.subr.mxu0 0.0
    %391 = vmatpush1.msra.mxu0 %v93
    %392 = vmatprep.mubr.f32.mxu0 %v327
    %393 = vmatmul.mubr.f32.gmra.mrb[0].mxu0 %v326
    %v394 = vpop.f32.mrb[0].mxu0
    %v395 = vadd.f32 0.0, %v394
    %v396 = vpop.f32.mrb[0].mxu0
    %397 = vdwg.mxu0
    %vm398 = vcmask 523264
    %399 = vst.msk [vmem:[#allocation3] sm:$0xff] %vm398, %v395
    %s400 = scalar_lea.vmem %s0, 4
    %v401 = vld [vmem:[%s400] sm:$0xf]
    %v402 = vunpack.c.l.bf16 %v401
    %v404 = vcombine.high %v402, %v402
    %406 = vrot.lane.b32.xlu0 %v402, 17
    %v407 = vpop.permute.xlu0 %406
    %408 = vrot.lane.b32.xlu0 %v404, 17
    %v409 = vpop.permute.xlu0 %408
    %v410 = vsel %vm103, %v407, %v409
    %v411 = vsel %vm103, %v409, %v407
    %v412 = vsel %vm108, %v411, 0.0
    %v413 = vsel %vm109, %v410, 0.0
    %414 = vst [vmem:[#allocation2] sm:$0xf] %v412
    %415 = vst [vmem:[#allocation2 + $0x8] sm:$0xf] %v413
    %416 = vrot.lane.b32.xlu0 %v402, 16
    %v417 = vpop.permute.xlu0 %416
    %418 = vrot.lane.b32.xlu0 %v404, 16
    %v419 = vpop.permute.xlu0 %418
    %v420 = vsel %vm118, %v417, %v419
    %v421 = vsel %vm118, %v419, %v417
    %v422 = vsel %vm123, %v421, 0.0
    %v423 = vsel %vm124, %v420, 0.0
    %424 = vst [vmem:[#allocation2 + $0x10] sm:$0xf] %v422
    %425 = vst [vmem:[#allocation2 + $0x18] sm:$0xf] %v423
    %426 = vrot.lane.b32.xlu0 %v402, 15
    %v427 = vpop.permute.xlu0 %426
    %428 = vrot.lane.b32.xlu0 %v404, 15
    %v429 = vpop.permute.xlu0 %428
    %v430 = vsel %vm133, %v427, %v429
    %v431 = vsel %vm133, %v429, %v427
    %v432 = vsel %vm138, %v431, 0.0
    %v433 = vsel %vm139, %v430, 0.0
    %434 = vst [vmem:[#allocation2 + $0x20] sm:$0xf] %v432
    %435 = vst [vmem:[#allocation2 + $0x28] sm:$0xf] %v433
    %436 = vrot.lane.b32.xlu0 %v402, 1
    %v437 = vpop.permute.xlu0 %436
    %438 = vrot.lane.b32.xlu0 %v404, 1
    %v439 = vpop.permute.xlu0 %438
    %v440 = vsel %vm148, %v437, %v439
    %v441 = vsel %vm148, %v439, %v437
    %v442 = vsel %vm153, %v441, 0.0
    %v443 = vsel %vm154, %v440, 0.0
    %444 = vst [vmem:[#allocation2 + $0x30] sm:$0xf] %v442
    %445 = vst [vmem:[#allocation2 + $0x38] sm:$0xf] %v443
    %446 = vst [vmem:[#allocation2 + $0x40] sm:$0xf] %v402
    %447 = vst [vmem:[#allocation2 + $0x48] sm:$0xf] %v404
    %448 = vrot.lane.b32.xlu0 %v402, 127
    %v449 = vpop.permute.xlu0 %448
    %450 = vrot.lane.b32.xlu0 %v404, 127
    %v451 = vpop.permute.xlu0 %450
    %v452 = vsel %vm165, %v449, %v451
    %v453 = vsel %vm165, %v451, %v449
    %v454 = vsel %vm170, %v452, 0.0
    %v455 = vsel %vm171, %v453, 0.0
    %456 = vst [vmem:[#allocation2 + $0x50] sm:$0xf] %v454
    %457 = vst [vmem:[#allocation2 + $0x58] sm:$0xf] %v455
    %458 = vrot.lane.b32.xlu0 %v402, 113
    %v459 = vpop.permute.xlu0 %458
    %460 = vrot.lane.b32.xlu0 %v404, 113
    %v461 = vpop.permute.xlu0 %460
    %v462 = vsel %vm180, %v459, %v461
    %v463 = vsel %vm180, %v461, %v459
    %v464 = vsel %vm185, %v462, 0.0
    %v465 = vsel %vm186, %v463, 0.0
    %466 = vst [vmem:[#allocation2 + $0x60] sm:$0xf] %v464
    %467 = vst [vmem:[#allocation2 + $0x68] sm:$0xf] %v465
    %468 = vrot.lane.b32.xlu0 %v402, 112
    %v469 = vpop.permute.xlu0 %468
    %470 = vrot.lane.b32.xlu0 %v404, 112
    %v471 = vpop.permute.xlu0 %470
    %v472 = vsel %vm195, %v469, %v471
    %v473 = vsel %vm195, %v471, %v469
    %v474 = vsel %vm200, %v472, 0.0
    %v475 = vsel %vm201, %v473, 0.0
    %476 = vst [vmem:[#allocation2 + $0x70] sm:$0xf] %v474
    %477 = vst [vmem:[#allocation2 + $0x78] sm:$0xf] %v475
    %478 = vrot.lane.b32.xlu0 %v402, 111
    %v479 = vpop.permute.xlu0 %478
    %480 = vrot.lane.b32.xlu0 %v404, 111
    %v481 = vpop.permute.xlu0 %480
    %v482 = vsel %vm210, %v479, %v481
    %v483 = vsel %vm210, %v481, %v479
    %v484 = vsel %vm215, %v482, 0.0
    %v485 = vsel %vm216, %v483, 0.0
    %486 = vst [vmem:[#allocation2 + $0x80] sm:$0xf] %v484
    %487 = vst [vmem:[#allocation2 + $0x88] sm:$0xf] %v485
    %v488 = vld [vmem:[#allocation2] sm:$0xff]
    %v489 = vld [vmem:[#allocation2 + $0x8] sm:$0xff]
    %v490 = vld [vmem:[#allocation2 + $0x10] sm:$0xff]
    %v491 = vld [vmem:[#allocation2 + $0x18] sm:$0xff]
    %v492 = vld [vmem:[#allocation2 + $0x20] sm:$0xff]
    %v493 = vld [vmem:[#allocation2 + $0x28] sm:$0xff]
    %v494 = vld [vmem:[#allocation2 + $0x30] sm:$0xff]
    %v495 = vld [vmem:[#allocation2 + $0x38] sm:$0xff]
    %v496 = vld [vmem:[#allocation2 + $0x40] sm:$0xff]
    %v497 = vld [vmem:[#allocation2 + $0x48] sm:$0xff]
    %v498 = vld [vmem:[#allocation2 + $0x50] sm:$0xff]
    %v499 = vld [vmem:[#allocation2 + $0x58] sm:$0xff]
    %v500 = vld [vmem:[#allocation2 + $0x60] sm:$0xff]
    %v501 = vld [vmem:[#allocation2 + $0x68] sm:$0xff]
    %v502 = vld [vmem:[#allocation2 + $0x70] sm:$0xff]
    %v503 = vld [vmem:[#allocation2 + $0x78] sm:$0xff]
    %v504 = vld [vmem:[#allocation2 + $0x80] sm:$0xff]
    %v505 = vld [vmem:[#allocation2 + $0x88] sm:$0xff]
    %v506 = vpack.c.bf16 %v490, %v488
    %v507 = vpack.c.bf16 %v491, %v489
    %v508 = vpack.c.bf16 %v494, %v492
    %v509 = vpack.c.bf16 %v495, %v493
    %v510 = vpack.c.bf16 %v498, %v496
    %v511 = vpack.c.bf16 %v499, %v497
    %v512 = vpack.c.bf16 %v502, %v500
    %v513 = vpack.c.bf16 %v503, %v501
    %v514 = vpack.c.bf16 %v504, %v504
    %v515 = vpack.c.bf16 %v505, %v505
    %v517 = vsel %vm258, %v514, 0
    %v520 = vsel %vm258, %v515, 0
    %522 = vmatprep.subr.bf16.mxu0 %v507
    %523 = vmatpush1.bf16.msra.mxu0 %v506
    %524 = vmatprep.subr.bf16.mxu0 %v509
    %525 = vmatpush1.bf16.msra.mxu0 %v508
    %526 = vmatprep.subr.bf16.mxu0 %v511
    %527 = vmatpush1.bf16.msra.mxu0 %v510
    %528 = vmatprep.subr.bf16.mxu0 %v513
    %529 = vmatpush1.bf16.msra.mxu0 %v512
    %530 = vmatprep.subr.bf16.mxu0 %v520
    %531 = vmatpush1.bf16.msra.mxu0 %v517
    %532 = vmatprep.subr.bf16.mxu0 0
    %533 = vmatpush1.bf16.msra.mxu0 0
    %534 = vmatprep.subr.bf16.mxu0 0
    %535 = vmatpush1.bf16.msra.mxu0 0
    %536 = vmatprep.subr.bf16.mxu0 0
    %537 = vmatpush1.bf16.msra.mxu0 0
    %538 = vmatprep.subr.bf16.mxu0 0
    %539 = vmatpush1.bf16.msra.mxu0 0
    %540 = vmatprep.subr.bf16.mxu0 0
    %541 = vmatpush1.bf16.msra.mxu0 0
    %542 = vmatprep.subr.bf16.mxu0 0
    %543 = vmatpush1.bf16.msra.mxu0 0
    %544 = vmatprep.subr.bf16.mxu0 0
    %545 = vmatpush1.bf16.msra.mxu0 0
    %546 = vmatprep.subr.bf16.mxu0 0
    %547 = vmatpush1.bf16.msra.mxu0 0
    %548 = vmatprep.subr.bf16.mxu0 0
    %549 = vmatpush1.bf16.msra.mxu0 0
    %550 = vmatprep.subr.bf16.mxu0 0
    %551 = vmatpush1.bf16.msra.mxu0 0
    %552 = vmatprep.subr.bf16.mxu0 0
    %553 = vmatpush1.bf16.msra.mxu0 0
    %554 = vmatprep.mubr.bf16.mxu0 0
    %555 = vmatmul.mubr.bf16.gmra.mrb[0].mxu0 %v256
    %v556 = vpop.f32.mrb[0].mxu0
    %v557 = vadd.f32 %v252, %v556
    %v558 = vpop.f32.mrb[0].mxu0
    %v559 = vadd.f32 %v252, %v558
    %v560 = vpop.f32.mrb[0].mxu0
    %v561 = vpop.f32.mrb[0].mxu0
    %562 = vdwg.mxu0
    %vm563 = vcmp.gt.f32.partialorder %v557, 0.0
    %vm564 = vcmp.gt.f32.partialorder %v559, 0.0
    %v565 = vmul.f32 %v557, 0.1
    %v566 = vmul.f32 %v559, 0.1
    %v567 = vsel %vm563, %v557, %v565
    %v568 = vsel %vm564, %v559, %v566
    %569 = vrot.lane.b32.xlu0 %v567, 127
    %v570 = vpop.permute.xlu0 %569
    %571 = vrot.lane.b32.xlu0 %v568, 127
    %v572 = vpop.permute.xlu0 %571
    %v573 = vsel %vm165, %v570, %v572
    %v574 = vsel %vm165, %v572, %v570
    %v575 = vmax.f32 %v567, %v573
    %v576 = vmax.f32 %v568, %v574
    %577 = vrot.lane.b32.xlu0 %v575, 112
    %v578 = vpop.permute.xlu0 %577
    %579 = vrot.lane.b32.xlu0 %v576, 112
    %v580 = vpop.permute.xlu0 %579
    %v581 = vsel %vm195, %v578, %v580
    %v582 = vsel %vm195, %v580, %v578
    %v583 = vmax.f32 %v575, %v581
    %v584 = vmax.f32 %v576, %v582
    %585 = vmatprep.subr.mxu0 0.0
    %586 = vmatpush1.msra.mxu0 %v62
    %587 = vmatprep.subr.mxu0 0.0
    %588 = vmatpush1.msra.mxu0 %v63
    %589 = vmatprep.subr.mxu0 0.0
    %590 = vmatpush1.msra.mxu0 %v64
    %591 = vmatprep.subr.mxu0 0.0
    %592 = vmatpush1.msra.mxu0 %v65
    %593 = vmatprep.subr.mxu0 0.0
    %594 = vmatpush1.msra.mxu0 %v66
    %595 = vmatprep.subr.mxu0 0.0
    %596 = vmatpush1.msra.mxu0 %v67
    %597 = vmatprep.subr.mxu0 0.0
    %598 = vmatpush1.msra.mxu0 %v68
    %599 = vmatprep.subr.mxu0 0.0
    %600 = vmatpush1.msra.mxu0 %v69
    %601 = vmatprep.subr.mxu0 0.0
    %602 = vmatpush1.msra.mxu0 %v70
    %603 = vmatprep.subr.mxu0 0.0
    %604 = vmatpush1.msra.mxu0 %v71
    %605 = vmatprep.subr.mxu0 0.0
    %606 = vmatpush1.msra.mxu0 %v72
    %607 = vmatprep.subr.mxu0 0.0
    %608 = vmatpush1.msra.mxu0 %v73
    %609 = vmatprep.subr.mxu0 0.0
    %610 = vmatpush1.msra.mxu0 %v74
    %611 = vmatprep.subr.mxu0 0.0
    %612 = vmatpush1.msra.mxu0 %v75
    %613 = vmatprep.subr.mxu0 0.0
    %614 = vmatpush1.msra.mxu0 %v76
    %615 = vmatprep.subr.mxu0 0.0
    %616 = vmatpush1.msra.mxu0 %v77
    %617 = vmatprep.subr.mxu0 0.0
    %618 = vmatpush1.msra.mxu0 %v78
    %619 = vmatprep.subr.mxu0 0.0
    %620 = vmatpush1.msra.mxu0 %v79
    %621 = vmatprep.subr.mxu0 0.0
    %622 = vmatpush1.msra.mxu0 %v80
    %623 = vmatprep.subr.mxu0 0.0
    %624 = vmatpush1.msra.mxu0 %v81
    %625 = vmatprep.subr.mxu0 0.0
    %626 = vmatpush1.msra.mxu0 %v82
    %627 = vmatprep.subr.mxu0 0.0
    %628 = vmatpush1.msra.mxu0 %v83
    %629 = vmatprep.subr.mxu0 0.0
    %630 = vmatpush1.msra.mxu0 %v84
    %631 = vmatprep.subr.mxu0 0.0
    %632 = vmatpush1.msra.mxu0 %v85
    %633 = vmatprep.subr.mxu0 0.0
    %634 = vmatpush1.msra.mxu0 %v86
    %635 = vmatprep.subr.mxu0 0.0
    %636 = vmatpush1.msra.mxu0 %v87
    %637 = vmatprep.subr.mxu0 0.0
    %638 = vmatpush1.msra.mxu0 %v88
    %639 = vmatprep.subr.mxu0 0.0
    %640 = vmatpush1.msra.mxu0 %v89
    %641 = vmatprep.subr.mxu0 0.0
    %642 = vmatpush1.msra.mxu0 %v90
    %643 = vmatprep.subr.mxu0 0.0
    %644 = vmatpush1.msra.mxu0 %v91
    %645 = vmatprep.subr.mxu0 0.0
    %646 = vmatpush1.msra.mxu0 %v92
    %647 = vmatprep.subr.mxu0 0.0
    %648 = vmatpush1.msra.mxu0 %v93
    %649 = vmatprep.mubr.f32.mxu0 %v584
    %650 = vmatmul.mubr.f32.gmra.mrb[0].mxu0 %v583
    %v651 = vpop.f32.mrb[0].mxu0
    %v652 = vadd.f32 0.0, %v651
    %v653 = vpop.f32.mrb[0].mxu0
    %654 = vdwg.mxu0
    %s655 = scalar_lea.vmem [#allocation3], 8
    %656 = vst.msk [vmem:[%s655] sm:$0xff] %vm398, %v652
    // Predicated region
    $region18: #{tpu_custom_call.1} parent=1 // pred_check
      _
    $region19: #{tpu_custom_call.1} parent=1 // pred_check_branch
      %658 = sbr.rel (0) target = $region21
    $region20: #{tpu_custom_call.1} parent=1 // pred_region
      %s660 = ssub.s32 256, 256
      %661 = vsyncadd [#allocation4], %s660
      %s662 = sshll.u32 [#allocation3], 4
      %s663 = int_to_ptr.vmem [resolvable:$true] %s662
      %668 = dma.vmem_to_hbm [thread:$0]  %s663, 256, %s4, [#allocation4], 128, 128, 8
    $region21: #{tpu_custom_call.1} parent=1 // pred_fallthru
      _
    // Predicated region
    $region22: #{tpu_custom_call.1} parent=1 // pred_check
      _
    $region23: #{tpu_custom_call.1} parent=1 // pred_check_branch
      %670 = sbr.rel (0) target = $region25
    $region24: #{tpu_custom_call.1} parent=1 // pred_region
      %671 = dma.done [#allocation4], 256
    $region25: #{tpu_custom_call.1} parent=1 // pred_fallthru
      _
    %672 = vsyncpa [#allocation4], 1

</llo_original>
